<compile_context>
chip_gen: v7x
topology: tpu7x:2x2x1
jax: 0.10.0
libtpu: 0.0.40
codegen_flags: <defaults>
</compile_context>

<pallas_src>
import functools

import jax
import jax.numpy as jnp
from jax.experimental import pallas as pl
from jax.experimental.pallas import tpu as pltpu

LANE = 128      # padded output-feature dim (lane width)
SUBLANE = 8     # f32 sublane


def policy_net_kernel(x_ref, w_ref, b_ref, o_ref):
    """Fused Linear(+bias) + softmax over the last axis.

    x_ref: (TB, K) f32 — activations (natural width, no padding)
    w_ref: (K,  N) f32 — W^T, output dim padded to 128 lanes (padding = 0)
    b_ref: (1,  N) f32 — bias row; padded output columns hold -1e30 so their
                         softmax probability is exactly 0
    o_ref: (TB, N) f32 — softmax probabilities (padded columns are 0)
    """
    logits = jnp.dot(x_ref[...], w_ref[...], preferred_element_type=jnp.float32)
    logits = logits + b_ref[...]                       # broadcast over rows
    m = jnp.max(logits, axis=-1, keepdims=True)
    e = jnp.exp(logits - m)
    denom = jnp.sum(e, axis=-1, keepdims=True)
    o_ref[...] = (e * pl.reciprocal(denom, approx=False)).astype(o_ref.dtype)


def pack_weights(w2, b2, *, n_pad=LANE):
    """Pack PyTorch-layout (OUT, IN) weight + (OUT,) bias.

    Returns:
      w_packed: (IN, n_pad) = W^T with zero-padded output columns
      b_packed: (1,  n_pad) = bias, padded output columns set to -1e30 so the
                softmax gives them probability 0.
    """
    out_f, in_f = w2.shape
    assert out_f <= n_pad
    w = jnp.zeros((in_f, n_pad), jnp.float32)
    w = w.at[:, :out_f].set(jnp.transpose(w2).astype(jnp.float32))
    b = jnp.full((1, n_pad), -1e30, jnp.float32)
    b = b.at[0, :out_f].set(b2.astype(jnp.float32))
    return w, b


@functools.partial(jax.jit, static_argnames=("out_features", "batch_tile"))
def policy_network_forward(x, w_packed, b_packed, *, out_features,
                           batch_tile=512):
    """Softmax(x @ W^T + b). x: (B, in_features) f32 -> (B, out_features) f32."""
    assert batch_tile % SUBLANE == 0
    B, in_f = x.shape
    K, N = w_packed.shape
    assert in_f == K, "x feature dim must match packed weight rows"
    x = x.astype(jnp.float32)

    if B <= batch_tile:
        # Small batch: gridless single-shot call, whole problem lives in VMEM.
        b_pad = max(SUBLANE, -(-B // SUBLANE) * SUBLANE)
        if b_pad != B:
            x = jnp.pad(x, ((0, b_pad - B), (0, 0)))
        out_p = pl.pallas_call(
            policy_net_kernel,
            out_shape=jax.ShapeDtypeStruct((b_pad, N), jnp.float32),
            in_specs=[pl.BlockSpec(memory_space=pltpu.MemorySpace.VMEM)] * 3,
            out_specs=pl.BlockSpec(memory_space=pltpu.MemorySpace.VMEM),
        )(x, w_packed, b_packed)
    else:
        # Large batch: tile B over a "parallel" grid (sharded across TCs on v7x).
        b_pad = -(-B // batch_tile) * batch_tile
        if b_pad != B:
            x = jnp.pad(x, ((0, b_pad - B), (0, 0)))
        out_p = pl.pallas_call(
            policy_net_kernel,
            out_shape=jax.ShapeDtypeStruct((b_pad, N), jnp.float32),
            grid=(b_pad // batch_tile,),
            in_specs=[pl.BlockSpec((batch_tile, K), lambda i: (i, 0)),
                      pl.BlockSpec((K, N), lambda i: (0, 0)),
                      pl.BlockSpec((1, N), lambda i: (0, 0))],
            out_specs=pl.BlockSpec((batch_tile, N), lambda i: (i, 0)),
            compiler_params=pltpu.CompilerParams(
                dimension_semantics=("parallel",)),
        )(x, w_packed, b_packed)

    return out_p[:B, :out_features]


if __name__ == "__main__":
    # Simulator().action_space() is unavailable; assume a 4x4 action grid.
    ACTION_H, ACTION_W = 4, 4
    space = ACTION_H * ACTION_W          # 16
    in_features = space * 2              # 32
    out_features = space                 # 16
    batch = 8                            # small demo batch

    key = jax.random.PRNGKey(0)
    kx, kw1, kb1, kw2, kb2 = jax.random.split(key, 5)

    bound = 1.0 / jnp.sqrt(float(in_features))
    # layer2 — the only layer used by forward(); PyTorch layout (OUT, IN).
    w2 = jax.random.uniform(kw2, (out_features, in_features), jnp.float32,
                            minval=-bound, maxval=bound)
    b2 = jax.random.uniform(kb2, (out_features,), jnp.float32,
                            minval=-bound, maxval=bound)
    # layer1 exists in __init__ but is unused by forward(); omitted here.
    # TODO(synk): saved_log_probs / rewards / Categorical sampling are training
    # bookkeeping outside forward(), so they are not translated.

    x = jax.random.normal(kx, (batch, in_features), jnp.float32)
    w_packed, b_packed = pack_weights(w2, b2)

    ref_fn = lambda xi: jax.nn.softmax(xi @ w2.T + b2, axis=-1)

    # 1) gridless small-batch path
    out = jax.block_until_ready(
        policy_network_forward(x, w_packed, b_packed,
                               out_features=out_features))
    assert out.shape == (batch, out_features)
    assert jnp.allclose(out, ref_fn(x), atol=1e-5, rtol=1e-5)
    assert jnp.allclose(jnp.sum(out, axis=-1), 1.0, atol=1e-5)

    # 2) non-multiple-of-8 batch (wrapper pads up to the f32 sublane)
    x2 = x[:2]
    out2 = jax.block_until_ready(
        policy_network_forward(x2, w_packed, b_packed,
                               out_features=out_features))
    assert out2.shape == (2, out_features)
    assert jnp.allclose(out2, ref_fn(x2), atol=1e-5, rtol=1e-5)

    # 3) tiled "parallel"-grid path (exercised with a tiny batch_tile)
    xb = jax.random.normal(kx, (24, in_features), jnp.float32)
    outb = jax.block_until_ready(
        policy_network_forward(xb, w_packed, b_packed,
                               out_features=out_features, batch_tile=8))
    assert outb.shape == (24, out_features)
    assert jnp.allclose(outb, ref_fn(xb), atol=1e-5, rtol=1e-5)

    print("KERNEL_OK")
</pallas_src>

<mosaic_0001>
module attributes {stable_mosaic.version = 11 : i64} {
  func.func @policy_net_kernel(%arg0: memref<8x32xf32, #tpu.memory_space<vmem>>, %arg1: memref<32x128xf32, #tpu.memory_space<vmem>>, %arg2: memref<1x128xf32, #tpu.memory_space<vmem>>, %arg3: memref<8x128xf32, #tpu.memory_space<vmem>>) attributes {dimension_semantics = [], scalar_prefetch = 0 : i64, scratch_operands = 0 : i64, tpu.core_type = #tpu.core_type<tc>} {
    %c0 = arith.constant 0 : index
    %c0_0 = arith.constant 0 : index
    %0 = vector.load %arg0[%c0, %c0_0] : memref<8x32xf32, #tpu.memory_space<vmem>>, vector<8x32xf32>
    %c0_1 = arith.constant 0 : index
    %c0_2 = arith.constant 0 : index
    %1 = vector.load %arg1[%c0_1, %c0_2] : memref<32x128xf32, #tpu.memory_space<vmem>>, vector<32x128xf32>
    %cst = arith.constant dense<0.000000e+00> : vector<8x128xf32>
    %2 = tpu.matmul %0, %1, %cst {dimension_numbers = #tpu.dot_dimension_numbers<[1], [0], [0], [1], [0, 0, 1, 1], [], []>} : vector<8x32xf32>, vector<32x128xf32>, vector<8x128xf32> -> vector<8x128xf32>
    %c0_3 = arith.constant 0 : index
    %c0_4 = arith.constant 0 : index
    %3 = vector.load %arg2[%c0_3, %c0_4] : memref<1x128xf32, #tpu.memory_space<vmem>>, vector<1x128xf32>
    %4 = vector.broadcast %3 : vector<1x128xf32> to vector<8x128xf32>
    %5 = arith.addf %2, %4 : vector<8x128xf32>
    %cst_5 = arith.constant dense<0xFF800000> : vector<8xf32>
    %6 = vector.multi_reduction <maximumf>, %5, %cst_5 [1] : vector<8x128xf32> to vector<8xf32>
    %7 = vector.shape_cast %6 : vector<8xf32> to vector<8x1xf32>
    %8 = vector.broadcast %7 : vector<8x1xf32> to vector<8x128xf32>
    %9 = arith.subf %5, %8 : vector<8x128xf32>
    %10 = math.exp %9 : vector<8x128xf32>
    %cst_6 = arith.constant dense<0.000000e+00> : vector<8xf32>
    %11 = vector.multi_reduction <add>, %10, %cst_6 [1] : vector<8x128xf32> to vector<8xf32>
    %12 = vector.shape_cast %11 : vector<8xf32> to vector<8x1xf32>
    %13 = tpu.reciprocal %12 : vector<8x1xf32> -> vector<8x1xf32>
    %14 = vector.broadcast %13 : vector<8x1xf32> to vector<8x128xf32>
    %15 = arith.mulf %10, %14 : vector<8x128xf32>
    %c0_7 = arith.constant 0 : index
    %c0_8 = arith.constant 0 : index
    %16 = vector.load %arg3[%c0_7, %c0_8] : memref<8x128xf32, #tpu.memory_space<vmem>>, vector<8x128xf32>
    tpu.vector_store %arg3[%c0_7, %c0_8], %15 {strides = array<i32>} : memref<8x128xf32, #tpu.memory_space<vmem>>, vector<8x128xf32>,
    return
  }
}

</mosaic_0001>

<llo_original>
// kernel: policy_network_forward.1
$region0: #{policy_network_forward.1}
  #allocation0 [shape = 'u32[]', space=smem, size = 0x4, offset = 0x4, fixed_abs, tag = 'smem constant byte address 0x4 - core index']
  #allocation1 [shape = 'u32[144,128]{1,0:T(1,128)}', space=vmem, size = 0x12000, scoped, tag = 'internal scratch']
  %s0 = inlined_call_operand.hbm [shape: f32[8,32], index: 0, kind: input, shape index: {}]
  %s1 = inlined_call_operand.hbm [shape: f32[32,128], index: 1, kind: input, shape index: {}]
  %s2 = inlined_call_operand.vmem [shape: f32[1,128], index: 2, kind: input, shape index: {}]
  %s3 = inlined_call_operand.hbm [shape: f32[8,128], index: 3, kind: output, shape index: {}]
  %s4 = sld [smem:[#allocation0]]
  $region30: #{policy_network_forward.1} parent=0
    _
  %s6 = ssub.s32 1, %s4
  %s7 = scalar_select 0, %s6, %s4
  $region1: #{policy_network_forward.1} parent=0
    #allocation2 [shape = 'u8[4096]{0}', space=vmem, size = 0x1000, scoped, tag = 'input window, operand 0, single buffered']
    #allocation3 [shape = 's32[1]{0}', space=sflag, size = 0x4, scoped, tag = 'scoped memory for policy_network_forward.1']
    #allocation4 [shape = 's32[1]{0}', space=sflag, size = 0x4, scoped, tag = 'scoped memory for policy_network_forward.1']
    #allocation5 [shape = 'u8[16384]{0}', space=vmem, size = 0x4000, scoped, tag = 'input window, operand 1, single buffered']
    #allocation6 [shape = 's32[1]{0}', space=sflag, size = 0x4, scoped, tag = 'scoped memory for policy_network_forward.1']
    #allocation7 [shape = 'u8[4096]{0}', space=vmem, size = 0x1000, scoped, tag = 'output window, operand 0, single buffered']
    %8 = vsyncpa [#allocation3], 0
    %9 = vsyncpa [#allocation6], 0
    %10 = vsyncpa [#allocation4], 0
    // Predicated region
    $region2: #{policy_network_forward.1} parent=1 // pred_check
      _
    $region3: #{policy_network_forward.1} parent=1 // pred_check_branch
      %12 = sbr.rel (0) target = $region5
    $region4: #{policy_network_forward.1} parent=1 // pred_region
      %s14 = ssub.s32 128, 128
      %15 = vsyncadd [#allocation3], %s14
      %s17 = sshll.u32 [#allocation2], 4
      %s18 = int_to_ptr.vmem [resolvable:$true] %s17
      %20 = dma.hbm_to_vmem [thread:$0]  %s0, 128, %s18, [#allocation3]
    $region5: #{policy_network_forward.1} parent=1 // pred_fallthru
      _
    // Predicated region
    $region6: #{policy_network_forward.1} parent=1 // pred_check
      _
    $region7: #{policy_network_forward.1} parent=1 // pred_check_branch
      %22 = sbr.rel (0) target = $region9
    $region8: #{policy_network_forward.1} parent=1 // pred_region
      %s24 = ssub.s32 512, 512
      %25 = vsyncadd [#allocation6], %s24
      %s26 = sshll.u32 [#allocation5], 4
      %s27 = int_to_ptr.vmem [resolvable:$true] %s26
      %32 = dma.hbm_to_vmem [thread:$0]  %s1, 512, %s27, [#allocation6], 128, 128, 8
    $region9: #{policy_network_forward.1} parent=1 // pred_fallthru
      _
    // Predicated region
    $region10: #{policy_network_forward.1} parent=1 // pred_check
      _
    $region11: #{policy_network_forward.1} parent=1 // pred_check_branch
      %34 = sbr.rel (0) target = $region13
    $region12: #{policy_network_forward.1} parent=1 // pred_region
      _
    $region13: #{policy_network_forward.1} parent=1 // pred_fallthru
      _
    // Predicated region
    $region14: #{policy_network_forward.1} parent=1 // pred_check
      _
    $region15: #{policy_network_forward.1} parent=1 // pred_check_branch
      %36 = sbr.rel (0) target = $region17
    $region16: #{policy_network_forward.1} parent=1 // pred_region
      %37 = dma.done [#allocation3], 128
    $region17: #{policy_network_forward.1} parent=1 // pred_fallthru
      _
    // Predicated region
    $region18: #{policy_network_forward.1} parent=1 // pred_check
      _
    $region19: #{policy_network_forward.1} parent=1 // pred_check_branch
      %39 = sbr.rel (0) target = $region21
    $region20: #{policy_network_forward.1} parent=1 // pred_region
      %40 = dma.done [#allocation6], 512
    $region21: #{policy_network_forward.1} parent=1 // pred_fallthru
      _
    %v41 = vld [vmem:[#allocation2] sm:$0xff]
    %v42 = vld [vmem:[#allocation5] sm:$0xff]
    %v43 = vld [vmem:[#allocation5 + $0x8] sm:$0xff]
    %v44 = vld [vmem:[#allocation5 + $0x10] sm:$0xff]
    %v45 = vld [vmem:[#allocation5 + $0x18] sm:$0xff]
    %v46 = vld [vmem:[%s2] sm:$0x1]
    %v48 = vlaneseq
    %v49 = vshrl.u32 %v48, 7
    %v50 = vsub.s32 0, %v49
    %v51 = vrot.slane %v46, %v50
    %vm53 = vcmask 261120
    %v55 = vsel %vm53, %v41, 0
    %57 = vmatprep.subr.mxu0 0.0
    %58 = vmatpush1.msra.mxu0 %v42
    %59 = vmatprep.subr.mxu0 0.0
    %60 = vmatpush1.msra.mxu0 %v43
    %61 = vmatprep.subr.mxu0 0.0
    %62 = vmatpush1.msra.mxu0 %v44
    %63 = vmatprep.subr.mxu0 0.0
    %64 = vmatpush1.msra.mxu0 %v45
    %65 = vmatprep.subr.mxu0 0.0
    %66 = vmatpush1.msra.mxu0 0.0
    %67 = vmatprep.subr.mxu0 0.0
    %68 = vmatpush1.msra.mxu0 0.0
    %69 = vmatprep.subr.mxu0 0.0
    %70 = vmatpush1.msra.mxu0 0.0
    %71 = vmatprep.subr.mxu0 0.0
    %72 = vmatpush1.msra.mxu0 0.0
    %73 = vmatprep.subr.mxu0 0.0
    %74 = vmatpush1.msra.mxu0 0.0
    %75 = vmatprep.subr.mxu0 0.0
    %76 = vmatpush1.msra.mxu0 0.0
    %77 = vmatprep.subr.mxu0 0.0
    %78 = vmatpush1.msra.mxu0 0.0
    %79 = vmatprep.subr.mxu0 0.0
    %80 = vmatpush1.msra.mxu0 0.0
    %81 = vmatprep.subr.mxu0 0.0
    %82 = vmatpush1.msra.mxu0 0.0
    %83 = vmatprep.subr.mxu0 0.0
    %84 = vmatpush1.msra.mxu0 0.0
    %85 = vmatprep.subr.mxu0 0.0
    %86 = vmatpush1.msra.mxu0 0.0
    %87 = vmatprep.subr.mxu0 0.0
    %88 = vmatpush1.msra.mxu0 0.0
    %89 = vmatprep.subr.mxu0 0.0
    %90 = vmatpush1.msra.mxu0 0.0
    %91 = vmatprep.subr.mxu0 0.0
    %92 = vmatpush1.msra.mxu0 0.0
    %93 = vmatprep.subr.mxu0 0.0
    %94 = vmatpush1.msra.mxu0 0.0
    %95 = vmatprep.subr.mxu0 0.0
    %96 = vmatpush1.msra.mxu0 0.0
    %97 = vmatprep.subr.mxu0 0.0
    %98 = vmatpush1.msra.mxu0 0.0
    %99 = vmatprep.subr.mxu0 0.0
    %100 = vmatpush1.msra.mxu0 0.0
    %101 = vmatprep.subr.mxu0 0.0
    %102 = vmatpush1.msra.mxu0 0.0
    %103 = vmatprep.subr.mxu0 0.0
    %104 = vmatpush1.msra.mxu0 0.0
    %105 = vmatprep.subr.mxu0 0.0
    %106 = vmatpush1.msra.mxu0 0.0
    %107 = vmatprep.subr.mxu0 0.0
    %108 = vmatpush1.msra.mxu0 0.0
    %109 = vmatprep.subr.mxu0 0.0
    %110 = vmatpush1.msra.mxu0 0.0
    %111 = vmatprep.subr.mxu0 0.0
    %112 = vmatpush1.msra.mxu0 0.0
    %113 = vmatprep.subr.mxu0 0.0
    %114 = vmatpush1.msra.mxu0 0.0
    %115 = vmatprep.subr.mxu0 0.0
    %116 = vmatpush1.msra.mxu0 0.0
    %117 = vmatprep.subr.mxu0 0.0
    %118 = vmatpush1.msra.mxu0 0.0
    %119 = vmatprep.subr.mxu0 0.0
    %120 = vmatpush1.msra.mxu0 0.0
    %121 = vmatprep.mubr.f32.mxu0 0.0
    %122 = vmatmul.mubr.f32.gmra.mrb[0].mxu0 %v55
    %v123 = vpop.f32.mrb[0].mxu0
    %v124 = vadd.f32 %v51, %v123
    %v125 = vpop.f32.mrb[0].mxu0
    %126 = vdwg.mxu0
    %127 = vmax.xlane.f32.xlu0 %v124
    %v128 = vpop.xlane.xlu0 %127
    %v129 = vsub.f32 %v124, %v128
    %v130 = vmul.f32 %v129, 1.442695
    %v131 = vpow.pop %v130
    %132 = vadd.xlane.f32.xlu0 %v131
    %v133 = vpop.xlane.xlu0 %132
    %v134 = vrcp.pop %v133
    %v135 = vmul.f32 %v131, %v134
    %136 = vst [vmem:[#allocation7] sm:$0xff] %v135
    // Predicated region
    $region22: #{policy_network_forward.1} parent=1 // pred_check
      _
    $region23: #{policy_network_forward.1} parent=1 // pred_check_branch
      %138 = sbr.rel (0) target = $region25
    $region24: #{policy_network_forward.1} parent=1 // pred_region
      %s140 = ssub.s32 128, 128
      %141 = vsyncadd [#allocation4], %s140
      %s143 = sshll.u32 [#allocation7], 4
      %s144 = int_to_ptr.vmem [resolvable:$true] %s143
      %146 = dma.vmem_to_hbm [thread:$0]  %s144, 128, %s3, [#allocation4]
    $region25: #{policy_network_forward.1} parent=1 // pred_fallthru
      _
    // Predicated region
    $region26: #{policy_network_forward.1} parent=1 // pred_check
      _
    $region27: #{policy_network_forward.1} parent=1 // pred_check_branch
      %148 = sbr.rel (0) target = $region29
    $region28: #{policy_network_forward.1} parent=1 // pred_region
      %149 = dma.done [#allocation4], 128
    $region29: #{policy_network_forward.1} parent=1 // pred_fallthru
      _
    %150 = vsyncpa [#allocation3], 1
    %151 = vsyncpa [#allocation6], 1
    %152 = vsyncpa [#allocation4], 1

</llo_original>
